<compile_context>
chip_gen: v5e
topology: v5e:2x2
jax: 0.10.0
libtpu: 0.0.40
codegen_flags: <defaults>
</compile_context>

<pallas_src>
import functools

import jax
import jax.numpy as jnp
from jax.experimental import pallas as pl
from jax.experimental.pallas import tpu as pltpu

EPS = 1e-5        # torch.nn.LayerNorm default
_VEC_ROWS = 16    # rows 0..15 of the slab hold the small vectors (see layout below)

# Slab layout (lane-padded to >=128 columns, f32):
#  row  0: ln1.gamma (hidden)      row  1: ln1.beta (hidden)
#  row  2: linear1.bias (128)      row  3: ln(128).gamma   row  4: ln(128).beta
#  row  5: linear2.bias (64)       row  6: ln(64).gamma    row  7: ln(64).beta
#  row  8: linear3[0].bias (64)    row  9: ln(64).gamma    row 10: ln(64).beta
#  row 11: linear3[-1].weight (64, as a row)               row 12: linear3[-1].bias (1)
#  rows 16..                       : W1   (hidden, 128)
#  rows 16+rup(hidden,8)..         : W3a  (128, 64)   == W3[:128]
#  next 64 rows                    : W3b  (64, 64)    == W3[128:]
#  next rup(n_num,8) rows          : W2   (n_num, 64)


def _rup(x, m):
    return -(-x // m) * m


def _layernorm(x, g, b):
    mu = jnp.mean(x, axis=-1, keepdims=True)
    var = jnp.mean((x - mu) ** 2, axis=-1, keepdims=True)   # biased var, like torch
    return (x - mu) * jax.lax.rsqrt(var + EPS) * g + b


def head_kernel(cls_ref, num_ref, p_ref, out_ref, *, hidden, n_num):
    # Static (Python-int) row offsets of the matrix blocks inside the param slab;
    # all sublane-aligned so the slices below are cheap tile-aligned views.
    r_w1 = _VEC_ROWS
    r_w3a = r_w1 + _rup(hidden, 8)
    r_w3b = r_w3a + 128
    r_w2 = r_w3b + 64

    # small vectors
    g0  = p_ref[0:1, :hidden]
    b0  = p_ref[1:2, :hidden]
    b1  = p_ref[2:3, :128]
    g1  = p_ref[3:4, :128]
    bb1 = p_ref[4:5, :128]
    b2  = p_ref[5:6, :64]
    g2  = p_ref[6:7, :64]
    bb2 = p_ref[7:8, :64]
    b3  = p_ref[8:9, :64]
    g3  = p_ref[9:10, :64]
    bb3 = p_ref[10:11, :64]
    w4  = p_ref[11:12, :64]
    b4  = p_ref[12:13, 0:1]

    # weight matrices
    w1  = p_ref[r_w1:r_w1 + hidden, :128]
    w3a = p_ref[r_w3a:r_w3a + 128, :64]
    w3b = p_ref[r_w3b:r_w3b + 64, :64]
    w2  = p_ref[r_w2:r_w2 + n_num, :64]

    # ln1 on the CLS embedding
    x = _layernorm(cls_ref[...], g0, b0)

    # linear1: Linear(H,128) -> LayerNorm(128) -> ReLU -> Dropout(eval: id)
    h1 = jnp.dot(x, w1, preferred_element_type=jnp.float32) + b1
    h1 = jnp.maximum(_layernorm(h1, g1, bb1), 0.0)

    # linear2: Linear(N,64) -> LayerNorm(64) -> ReLU -> Dropout(eval: id)
    h2 = jnp.dot(num_ref[...], w2, preferred_element_type=jnp.float32) + b2
    h2 = jnp.maximum(_layernorm(h2, g2, bb2), 0.0)

    # cat([h1, h2]) @ W3 == h1 @ W3[:128] + h2 @ W3[128:]  (avoids in-kernel concat;
    # matches torch.cat([linear1_out, linear2_out], -1) ordering)
    h3 = (jnp.dot(h1, w3a, preferred_element_type=jnp.float32)
          + jnp.dot(h2, w3b, preferred_element_type=jnp.float32)
          + b3)
    h3 = jnp.maximum(_layernorm(h3, g3, bb3), 0.0)

    # final Linear(64, 1): VPU multiply + lane reduce (no width-1 MXU matmul)
    out_ref[...] = jnp.sum(h3 * w4, axis=-1, keepdims=True) + b4


def custom_model1_head(cls_emb, numeric_x, p_slab, *, tile_b=128):
    B, hidden = cls_emb.shape
    n_num = numeric_x.shape[1]
    if B <= tile_b:
        tile_b = B                       # single tile; full-extent block is always legal
    grid = (pl.cdiv(B, tile_b),)

    batch = lambda i: (i, 0)             # batch-tiled arrays
    fixed = lambda i: (0, 0)             # params stay VMEM-resident across batch tiles

    kernel = functools.partial(head_kernel, hidden=hidden, n_num=n_num)
    return pl.pallas_call(
        kernel,
        out_shape=jax.ShapeDtypeStruct((B, 1), jnp.float32),
        grid=grid,
        in_specs=[
            pl.BlockSpec((tile_b, hidden), batch),
            pl.BlockSpec((tile_b, n_num), batch),
            pl.BlockSpec(p_slab.shape, fixed),
        ],
        out_specs=pl.BlockSpec((tile_b, 1), batch),
        compiler_params=pltpu.CompilerParams(
            dimension_semantics=("parallel",),   # megacore shards batch tiles on v7x
            vmem_limit_bytes=32 * 1024 * 1024,
        ),
    )(cls_emb, numeric_x, p_slab)


def pack_params(*, ln1_g, ln1_b, w1, b1, ln2_g, ln2_b, w2, b2,
                ln3_g, ln3_b, w3, b3, ln4_g, ln4_b, w4, b4):
    """Pack all head params into one lane-padded f32 slab (see layout above)."""
    hidden = w1.shape[0]
    n_num = w2.shape[0]
    lane = max(128, _rup(hidden, 128))
    r_w1 = _VEC_ROWS
    r_w3a = r_w1 + _rup(hidden, 8)
    r_w3b = r_w3a + 128
    r_w2 = r_w3b + 64
    rows = r_w2 + _rup(n_num, 8)
    slab = jnp.zeros((rows, lane), jnp.float32)

    def put_vec(s, r, v):
        v = jnp.reshape(jnp.asarray(v, jnp.float32), (-1,))
        return s.at[r, :v.shape[0]].set(v)

    def put_mat(s, r, m):
        m = jnp.asarray(m, jnp.float32)
        return s.at[r:r + m.shape[0], :m.shape[1]].set(m)

    slab = put_vec(slab, 0, ln1_g)
    slab = put_vec(slab, 1, ln1_b)
    slab = put_vec(slab, 2, b1)
    slab = put_vec(slab, 3, ln2_g)
    slab = put_vec(slab, 4, ln2_b)
    slab = put_vec(slab, 5, b2)
    slab = put_vec(slab, 6, ln3_g)
    slab = put_vec(slab, 7, ln3_b)
    slab = put_vec(slab, 8, b3)
    slab = put_vec(slab, 9, ln4_g)
    slab = put_vec(slab, 10, ln4_b)
    slab = put_vec(slab, 11, w4)                 # (64,1) flattened to a row
    slab = put_vec(slab, 12, b4)
    slab = put_mat(slab, r_w1, w1)               # (hidden, 128)
    slab = put_mat(slab, r_w3a, w3[:128, :])     # (128, 64)
    slab = put_mat(slab, r_w3b, w3[128:, :])     # (64, 64)
    slab = put_mat(slab, r_w2, w2)               # (n_num, 64)
    return slab


def init_params(key, hidden, n_numeric):
    ks = jax.random.split(key, 4)

    def lin(k, fan_in, fan_out):
        # deterministic uniform init similar to torch's default Linear init
        bound = 1.0 / jnp.sqrt(float(fan_in))
        kw, kb = jax.random.split(k)
        w = jax.random.uniform(kw, (fan_in, fan_out), jnp.float32, -bound, bound)
        b = jax.random.uniform(kb, (fan_out,), jnp.float32, -bound, bound)
        return w, b

    w1, b1 = lin(ks[0], hidden, 128)             # linear1[0]
    w2, b2 = lin(ks[1], n_numeric, 64)           # linear2[0]
    w3, b3 = lin(ks[2], 128 + 64, 64)            # linear3[0]
    w4, b4 = lin(ks[3], 64, 1)                   # linear3[-1]
    return dict(
        ln1_g=jnp.ones((hidden,), jnp.float32), ln1_b=jnp.zeros((hidden,), jnp.float32),
        w1=w1, b1=b1,
        ln2_g=jnp.ones((128,), jnp.float32), ln2_b=jnp.zeros((128,), jnp.float32),
        w2=w2, b2=b2,
        ln3_g=jnp.ones((64,), jnp.float32), ln3_b=jnp.zeros((64,), jnp.float32),
        w3=w3, b3=b3,
        ln4_g=jnp.ones((64,), jnp.float32), ln4_b=jnp.zeros((64,), jnp.float32),
        w4=w4, b4=b4,
    )


def _reference(cls_emb, numeric_x, p):
    # pure-JAX reference mirroring the torch forward (eval mode)
    def ln(x, g, b):
        mu = x.mean(-1, keepdims=True)
        var = ((x - mu) ** 2).mean(-1, keepdims=True)
        return (x - mu) / jnp.sqrt(var + EPS) * g + b

    x = ln(cls_emb, p["ln1_g"], p["ln1_b"])
    h1 = jnp.maximum(ln(x @ p["w1"] + p["b1"], p["ln2_g"], p["ln2_b"]), 0.0)
    h2 = jnp.maximum(ln(numeric_x @ p["w2"] + p["b2"], p["ln3_g"], p["ln3_b"]), 0.0)
    h = jnp.concatenate([h1, h2], axis=-1)
    h3 = jnp.maximum(ln(h @ p["w3"] + p["b3"], p["ln4_g"], p["ln4_b"]), 0.0)
    return h3 @ p["w4"] + p["b4"]


if __name__ == "__main__":
    B, HIDDEN, N_NUMERIC = 8, 32, 8

    key = jax.random.PRNGKey(0)
    k_cls, k_num, k_par = jax.random.split(key, 3)

    # stand-in for model(**inputs)['last_hidden_state'][:, 0, :]
    cls_emb = jax.random.normal(k_cls, (B, HIDDEN), jnp.float32)
    numeric_x = jax.random.normal(k_num, (B, N_NUMERIC), jnp.float32)

    params = init_params(k_par, HIDDEN, N_NUMERIC)
    slab = pack_params(**params)

    out = custom_model1_head(cls_emb, numeric_x, slab)
    out = jax.block_until_ready(out)

    ref = _reference(cls_emb, numeric_x, params)
    assert out.shape == (B, 1)
    assert bool(jnp.all(jnp.isfinite(out)))
    assert bool(jnp.allclose(out, ref, rtol=1e-4, atol=1e-5))
    print("KERNEL_OK")
</pallas_src>

<mosaic_0001>
module attributes {stable_mosaic.version = 11 : i64} {
  func.func @head_kernel(%arg0: i32, %arg1: memref<8x32xf32, #tpu.memory_space<vmem>>, %arg2: memref<8x8xf32, #tpu.memory_space<vmem>>, %arg3: memref<248x128xf32, #tpu.memory_space<vmem>>, %arg4: memref<8x1xf32, #tpu.memory_space<vmem>>) attributes {dimension_semantics = [#tpu.dimension_semantics<parallel>], iteration_bounds = array<i64: 1>, scalar_prefetch = 0 : i64, scratch_operands = 0 : i64, tpu.core_type = #tpu.core_type<tc>, window_params = [{transform_indices = @transform_0, window_bounds = array<i64: 8, 32>}, {transform_indices = @transform_1, window_bounds = array<i64: 8, 8>}, {pipeline_mode = #tpu.pipeline_mode<synchronous>, transform_indices = @transform_2, window_bounds = array<i64: 248, 128>}, {transform_indices = @transform_3, window_bounds = array<i64: 8, 1>}]} {
    %c0 = arith.constant 0 : index
    %c0_0 = arith.constant 0 : index
    %0 = vector.load %arg3[%c0, %c0_0] : memref<248x128xf32, #tpu.memory_space<vmem>>, vector<1x32xf32>
    %c1 = arith.constant 1 : index
    %c0_1 = arith.constant 0 : index
    %1 = vector.load %arg3[%c1, %c0_1] : memref<248x128xf32, #tpu.memory_space<vmem>>, vector<1x32xf32>
    %c2 = arith.constant 2 : index
    %c0_2 = arith.constant 0 : index
    %2 = vector.load %arg3[%c2, %c0_2] : memref<248x128xf32, #tpu.memory_space<vmem>>, vector<1x128xf32>
    %c3 = arith.constant 3 : index
    %c0_3 = arith.constant 0 : index
    %3 = vector.load %arg3[%c3, %c0_3] : memref<248x128xf32, #tpu.memory_space<vmem>>, vector<1x128xf32>
    %c4 = arith.constant 4 : index
    %c0_4 = arith.constant 0 : index
    %4 = vector.load %arg3[%c4, %c0_4] : memref<248x128xf32, #tpu.memory_space<vmem>>, vector<1x128xf32>
    %c5 = arith.constant 5 : index
    %c0_5 = arith.constant 0 : index
    %5 = vector.load %arg3[%c5, %c0_5] : memref<248x128xf32, #tpu.memory_space<vmem>>, vector<1x64xf32>
    %c6 = arith.constant 6 : index
    %c0_6 = arith.constant 0 : index
    %6 = vector.load %arg3[%c6, %c0_6] : memref<248x128xf32, #tpu.memory_space<vmem>>, vector<1x64xf32>
    %c7 = arith.constant 7 : index
    %c0_7 = arith.constant 0 : index
    %7 = vector.load %arg3[%c7, %c0_7] : memref<248x128xf32, #tpu.memory_space<vmem>>, vector<1x64xf32>
    %c8 = arith.constant 8 : index
    %c0_8 = arith.constant 0 : index
    %8 = vector.load %arg3[%c8, %c0_8] : memref<248x128xf32, #tpu.memory_space<vmem>>, vector<1x64xf32>
    %c9 = arith.constant 9 : index
    %c0_9 = arith.constant 0 : index
    %9 = vector.load %arg3[%c9, %c0_9] : memref<248x128xf32, #tpu.memory_space<vmem>>, vector<1x64xf32>
    %c10 = arith.constant 10 : index
    %c0_10 = arith.constant 0 : index
    %10 = vector.load %arg3[%c10, %c0_10] : memref<248x128xf32, #tpu.memory_space<vmem>>, vector<1x64xf32>
    %c11 = arith.constant 11 : index
    %c0_11 = arith.constant 0 : index
    %11 = vector.load %arg3[%c11, %c0_11] : memref<248x128xf32, #tpu.memory_space<vmem>>, vector<1x64xf32>
    %c12 = arith.constant 12 : index
    %c0_12 = arith.constant 0 : index
    %12 = vector.load %arg3[%c12, %c0_12] : memref<248x128xf32, #tpu.memory_space<vmem>>, vector<1x1xf32>
    %c16 = arith.constant 16 : index
    %c0_13 = arith.constant 0 : index
    %13 = vector.load %arg3[%c16, %c0_13] : memref<248x128xf32, #tpu.memory_space<vmem>>, vector<32x128xf32>
    %c48 = arith.constant 48 : index
    %c0_14 = arith.constant 0 : index
    %14 = vector.load %arg3[%c48, %c0_14] : memref<248x128xf32, #tpu.memory_space<vmem>>, vector<128x64xf32>
    %c176 = arith.constant 176 : index
    %c0_15 = arith.constant 0 : index
    %15 = vector.load %arg3[%c176, %c0_15] : memref<248x128xf32, #tpu.memory_space<vmem>>, vector<64x64xf32>
    %c240 = arith.constant 240 : index
    %c0_16 = arith.constant 0 : index
    %16 = vector.load %arg3[%c240, %c0_16] : memref<248x128xf32, #tpu.memory_space<vmem>>, vector<8x64xf32>
    %c0_17 = arith.constant 0 : index
    %c0_18 = arith.constant 0 : index
    %17 = vector.load %arg1[%c0_17, %c0_18] : memref<8x32xf32, #tpu.memory_space<vmem>>, vector<8x32xf32>
    %cst = arith.constant dense<0.000000e+00> : vector<8xf32>
    %18 = vector.multi_reduction <add>, %17, %cst [1] : vector<8x32xf32> to vector<8xf32>
    %19 = vector.shape_cast %18 : vector<8xf32> to vector<8x1xf32>
    %cst_19 = arith.constant 3.200000e+01 : f32
    %20 = vector.broadcast %cst_19 : f32 to vector<8x1xf32>
    %21 = arith.divf %19, %20 : vector<8x1xf32>
    %22 = vector.broadcast %21 : vector<8x1xf32> to vector<8x32xf32>
    %23 = arith.subf %17, %22 : vector<8x32xf32>
    %24 = arith.mulf %23, %23 : vector<8x32xf32>
    %cst_20 = arith.constant dense<0.000000e+00> : vector<8xf32>
    %25 = vector.multi_reduction <add>, %24, %cst_20 [1] : vector<8x32xf32> to vector<8xf32>
    %26 = vector.shape_cast %25 : vector<8xf32> to vector<8x1xf32>
    %cst_21 = arith.constant 3.200000e+01 : f32
    %27 = vector.broadcast %cst_21 : f32 to vector<8x1xf32>
    %28 = arith.divf %26, %27 : vector<8x1xf32>
    %29 = vector.broadcast %21 : vector<8x1xf32> to vector<8x32xf32>
    %30 = arith.subf %17, %29 : vector<8x32xf32>
    %cst_22 = arith.constant 9.99999974E-6 : f32
    %31 = vector.broadcast %cst_22 : f32 to vector<8x1xf32>
    %32 = arith.addf %28, %31 : vector<8x1xf32>
    %33 = math.rsqrt %32 : vector<8x1xf32>
    %34 = vector.broadcast %33 : vector<8x1xf32> to vector<8x32xf32>
    %35 = arith.mulf %30, %34 : vector<8x32xf32>
    %36 = vector.broadcast %0 : vector<1x32xf32> to vector<8x32xf32>
    %37 = arith.mulf %35, %36 : vector<8x32xf32>
    %38 = vector.broadcast %1 : vector<1x32xf32> to vector<8x32xf32>
    %39 = arith.addf %37, %38 : vector<8x32xf32>
    %cst_23 = arith.constant dense<0.000000e+00> : vector<8x128xf32>
    %40 = tpu.matmul %39, %13, %cst_23 {dimension_numbers = #tpu.dot_dimension_numbers<[1], [0], [0], [1], [0, 0, 1, 1], [], []>} : vector<8x32xf32>, vector<32x128xf32>, vector<8x128xf32> -> vector<8x128xf32>
    %41 = vector.broadcast %2 : vector<1x128xf32> to vector<8x128xf32>
    %42 = arith.addf %40, %41 : vector<8x128xf32>
    %cst_24 = arith.constant dense<0.000000e+00> : vector<8xf32>
    %43 = vector.multi_reduction <add>, %42, %cst_24 [1] : vector<8x128xf32> to vector<8xf32>
    %44 = vector.shape_cast %43 : vector<8xf32> to vector<8x1xf32>
    %cst_25 = arith.constant 1.280000e+02 : f32
    %45 = vector.broadcast %cst_25 : f32 to vector<8x1xf32>
    %46 = arith.divf %44, %45 : vector<8x1xf32>
    %47 = vector.broadcast %46 : vector<8x1xf32> to vector<8x128xf32>
    %48 = arith.subf %42, %47 : vector<8x128xf32>
    %49 = arith.mulf %48, %48 : vector<8x128xf32>
    %cst_26 = arith.constant dense<0.000000e+00> : vector<8xf32>
    %50 = vector.multi_reduction <add>, %49, %cst_26 [1] : vector<8x128xf32> to vector<8xf32>
    %51 = vector.shape_cast %50 : vector<8xf32> to vector<8x1xf32>
    %cst_27 = arith.constant 1.280000e+02 : f32
    %52 = vector.broadcast %cst_27 : f32 to vector<8x1xf32>
    %53 = arith.divf %51, %52 : vector<8x1xf32>
    %54 = vector.broadcast %46 : vector<8x1xf32> to vector<8x128xf32>
    %55 = arith.subf %42, %54 : vector<8x128xf32>
    %cst_28 = arith.constant 9.99999974E-6 : f32
    %56 = vector.broadcast %cst_28 : f32 to vector<8x1xf32>
    %57 = arith.addf %53, %56 : vector<8x1xf32>
    %58 = math.rsqrt %57 : vector<8x1xf32>
    %59 = vector.broadcast %58 : vector<8x1xf32> to vector<8x128xf32>
    %60 = arith.mulf %55, %59 : vector<8x128xf32>
    %61 = vector.broadcast %3 : vector<1x128xf32> to vector<8x128xf32>
    %62 = arith.mulf %60, %61 : vector<8x128xf32>
    %63 = vector.broadcast %4 : vector<1x128xf32> to vector<8x128xf32>
    %64 = arith.addf %62, %63 : vector<8x128xf32>
    %cst_29 = arith.constant 0.000000e+00 : f32
    %65 = vector.broadcast %cst_29 : f32 to vector<8x128xf32>
    %66 = arith.maximumf %64, %65 : vector<8x128xf32>
    %c0_30 = arith.constant 0 : index
    %c0_31 = arith.constant 0 : index
    %67 = vector.load %arg2[%c0_30, %c0_31] : memref<8x8xf32, #tpu.memory_space<vmem>>, vector<8x8xf32>
    %cst_32 = arith.constant dense<0.000000e+00> : vector<8x64xf32>
    %68 = tpu.matmul %67, %16, %cst_32 {dimension_numbers = #tpu.dot_dimension_numbers<[1], [0], [0], [1], [0, 0, 1, 1], [], []>} : vector<8x8xf32>, vector<8x64xf32>, vector<8x64xf32> -> vector<8x64xf32>
    %69 = vector.broadcast %5 : vector<1x64xf32> to vector<8x64xf32>
    %70 = arith.addf %68, %69 : vector<8x64xf32>
    %cst_33 = arith.constant dense<0.000000e+00> : vector<8xf32>
    %71 = vector.multi_reduction <add>, %70, %cst_33 [1] : vector<8x64xf32> to vector<8xf32>
    %72 = vector.shape_cast %71 : vector<8xf32> to vector<8x1xf32>
    %cst_34 = arith.constant 6.400000e+01 : f32
    %73 = vector.broadcast %cst_34 : f32 to vector<8x1xf32>
    %74 = arith.divf %72, %73 : vector<8x1xf32>
    %75 = vector.broadcast %74 : vector<8x1xf32> to vector<8x64xf32>
    %76 = arith.subf %70, %75 : vector<8x64xf32>
    %77 = arith.mulf %76, %76 : vector<8x64xf32>
    %cst_35 = arith.constant dense<0.000000e+00> : vector<8xf32>
    %78 = vector.multi_reduction <add>, %77, %cst_35 [1] : vector<8x64xf32> to vector<8xf32>
    %79 = vector.shape_cast %78 : vector<8xf32> to vector<8x1xf32>
    %cst_36 = arith.constant 6.400000e+01 : f32
    %80 = vector.broadcast %cst_36 : f32 to vector<8x1xf32>
    %81 = arith.divf %79, %80 : vector<8x1xf32>
    %82 = vector.broadcast %74 : vector<8x1xf32> to vector<8x64xf32>
    %83 = arith.subf %70, %82 : vector<8x64xf32>
    %cst_37 = arith.constant 9.99999974E-6 : f32
    %84 = vector.broadcast %cst_37 : f32 to vector<8x1xf32>
    %85 = arith.addf %81, %84 : vector<8x1xf32>
    %86 = math.rsqrt %85 : vector<8x1xf32>
    %87 = vector.broadcast %86 : vector<8x1xf32> to vector<8x64xf32>
    %88 = arith.mulf %83, %87 : vector<8x64xf32>
    %89 = vector.broadcast %6 : vector<1x64xf32> to vector<8x64xf32>
    %90 = arith.mulf %88, %89 : vector<8x64xf32>
    %91 = vector.broadcast %7 : vector<1x64xf32> to vector<8x64xf32>
    %92 = arith.addf %90, %91 : vector<8x64xf32>
    %cst_38 = arith.constant 0.000000e+00 : f32
    %93 = vector.broadcast %cst_38 : f32 to vector<8x64xf32>
    %94 = arith.maximumf %92, %93 : vector<8x64xf32>
    %cst_39 = arith.constant dense<0.000000e+00> : vector<8x64xf32>
    %95 = tpu.matmul %66, %14, %cst_39 {dimension_numbers = #tpu.dot_dimension_numbers<[1], [0], [0], [1], [0, 0, 1, 1], [], []>} : vector<8x128xf32>, vector<128x64xf32>, vector<8x64xf32> -> vector<8x64xf32>
    %cst_40 = arith.constant dense<0.000000e+00> : vector<8x64xf32>
    %96 = tpu.matmul %94, %15, %cst_40 {dimension_numbers = #tpu.dot_dimension_numbers<[1], [0], [0], [1], [0, 0, 1, 1], [], []>} : vector<8x64xf32>, vector<64x64xf32>, vector<8x64xf32> -> vector<8x64xf32>
    %97 = arith.addf %95, %96 : vector<8x64xf32>
    %98 = vector.broadcast %8 : vector<1x64xf32> to vector<8x64xf32>
    %99 = arith.addf %97, %98 : vector<8x64xf32>
    %cst_41 = arith.constant dense<0.000000e+00> : vector<8xf32>
    %100 = vector.multi_reduction <add>, %99, %cst_41 [1] : vector<8x64xf32> to vector<8xf32>
    %101 = vector.shape_cast %100 : vector<8xf32> to vector<8x1xf32>
    %cst_42 = arith.constant 6.400000e+01 : f32
    %102 = vector.broadcast %cst_42 : f32 to vector<8x1xf32>
    %103 = arith.divf %101, %102 : vector<8x1xf32>
    %104 = vector.broadcast %103 : vector<8x1xf32> to vector<8x64xf32>
    %105 = arith.subf %99, %104 : vector<8x64xf32>
    %106 = arith.mulf %105, %105 : vector<8x64xf32>
    %cst_43 = arith.constant dense<0.000000e+00> : vector<8xf32>
    %107 = vector.multi_reduction <add>, %106, %cst_43 [1] : vector<8x64xf32> to vector<8xf32>
    %108 = vector.shape_cast %107 : vector<8xf32> to vector<8x1xf32>
    %cst_44 = arith.constant 6.400000e+01 : f32
    %109 = vector.broadcast %cst_44 : f32 to vector<8x1xf32>
    %110 = arith.divf %108, %109 : vector<8x1xf32>
    %111 = vector.broadcast %103 : vector<8x1xf32> to vector<8x64xf32>
    %112 = arith.subf %99, %111 : vector<8x64xf32>
    %cst_45 = arith.constant 9.99999974E-6 : f32
    %113 = vector.broadcast %cst_45 : f32 to vector<8x1xf32>
    %114 = arith.addf %110, %113 : vector<8x1xf32>
    %115 = math.rsqrt %114 : vector<8x1xf32>
    %116 = vector.broadcast %115 : vector<8x1xf32> to vector<8x64xf32>
    %117 = arith.mulf %112, %116 : vector<8x64xf32>
    %118 = vector.broadcast %9 : vector<1x64xf32> to vector<8x64xf32>
    %119 = arith.mulf %117, %118 : vector<8x64xf32>
    %120 = vector.broadcast %10 : vector<1x64xf32> to vector<8x64xf32>
    %121 = arith.addf %119, %120 : vector<8x64xf32>
    %cst_46 = arith.constant 0.000000e+00 : f32
    %122 = vector.broadcast %cst_46 : f32 to vector<8x64xf32>
    %123 = arith.maximumf %121, %122 : vector<8x64xf32>
    %124 = vector.broadcast %11 : vector<1x64xf32> to vector<8x64xf32>
    %125 = arith.mulf %123, %124 : vector<8x64xf32>
    %cst_47 = arith.constant dense<0.000000e+00> : vector<8xf32>
    %126 = vector.multi_reduction <add>, %125, %cst_47 [1] : vector<8x64xf32> to vector<8xf32>
    %127 = vector.shape_cast %126 : vector<8xf32> to vector<8x1xf32>
    %128 = vector.broadcast %12 : vector<1x1xf32> to vector<8x1xf32>
    %129 = arith.addf %127, %128 : vector<8x1xf32>
    %c0_48 = arith.constant 0 : index
    %c0_49 = arith.constant 0 : index
    %130 = vector.load %arg4[%c0_48, %c0_49] : memref<8x1xf32, #tpu.memory_space<vmem>>, vector<8x1xf32>
    tpu.vector_store %arg4[%c0_48, %c0_49], %129 {strides = array<i32>} : memref<8x1xf32, #tpu.memory_space<vmem>>, vector<8x1xf32>,
    return
  }
  func.func @transform_0(%arg0: i32) -> (i32, i32) {
    %c0_i32 = arith.constant 0 : i32
    %c0_i32_0 = arith.constant 0 : i32
    return %arg0, %c0_i32 : i32, i32
  }
  func.func @transform_1(%arg0: i32) -> (i32, i32) {
    %c0_i32 = arith.constant 0 : i32
    %c0_i32_0 = arith.constant 0 : i32
    return %arg0, %c0_i32 : i32, i32
  }
  func.func @transform_2(%arg0: i32) -> (i32, i32) {
    %c0_i32 = arith.constant 0 : i32
    %c0_i32_0 = arith.constant 0 : i32
    %c0_i32_1 = arith.constant 0 : i32
    return %c0_i32, %c0_i32_0 : i32, i32
  }
  func.func @transform_3(%arg0: i32) -> (i32, i32) {
    %c0_i32 = arith.constant 0 : i32
    %c0_i32_0 = arith.constant 0 : i32
    return %arg0, %c0_i32 : i32, i32
  }
}

</mosaic_0001>

<llo_original>
// kernel: tpu_custom_call.1
$region0: #{tpu_custom_call.1}
  #allocation0 [shape = 'u32[]', space=smem, size = 0x4, offset = 0x4, fixed_abs, tag = 'smem constant byte address 0x4 - core index']
  #allocation1 [shape = 'u32[72,128]{1,0:T(1,128)}', space=vmem, size = 0x9000, scoped, tag = 'internal scratch']
  %s0 = inlined_call_operand.hbm [shape: f32[8,32], index: 0, kind: input, shape index: {}]
  %s1 = inlined_call_operand.hbm [shape: f32[8,8], index: 1, kind: input, shape index: {}]
  %s2 = inlined_call_operand.hbm [shape: f32[248,128], index: 2, kind: input, shape index: {}]
  %s3 = inlined_call_operand.vmem [shape: f32[8,1], index: 3, kind: output, shape index: {}]
  %s4 = sld [smem:[#allocation0]]
  $region34: #{tpu_custom_call.1} parent=0
    _
  %s6 = ssub.s32 1, %s4
  %s7 = scalar_select 0, %s6, %s4
  $region1: #{tpu_custom_call.1} parent=0
    #allocation2 [shape = 'u8[4096]{0}', space=vmem, size = 0x1000, scoped, tag = 'input window, operand 0, single buffered']
    #allocation3 [shape = 's32[1]{0}', space=sflag, size = 0x4, scoped, tag = 'scoped memory for tpu_custom_call.1']
    #allocation4 [shape = 'u8[4096]{0}', space=vmem, size = 0x1000, scoped, tag = 'input window, operand 1, single buffered']
    #allocation5 [shape = 's32[1]{0}', space=sflag, size = 0x4, scoped, tag = 'scoped memory for tpu_custom_call.1']
    #allocation6 [shape = 'u8[126976]{0}', space=vmem, size = 0x1f000, scoped, tag = 'input window, operand 2, single buffered']
    %8 = vsyncpa [#allocation3], 0
    %9 = vsyncpa [#allocation5], 0
    // Predicated region
    $region2: #{tpu_custom_call.1} parent=1 // pred_check
      _
    $region3: #{tpu_custom_call.1} parent=1 // pred_check_branch
      %11 = sbr.rel (0) target = $region5
    $region4: #{tpu_custom_call.1} parent=1 // pred_region
      %13 = vsyncadd [#allocation3], 0
      %s15 = sshll.u32 %s0, 4
      %s16 = int_to_ptr.hbm [resolvable:$true] %s15
      %s17 = sshll.u32 [#allocation2], 4
      %s18 = int_to_ptr.vmem [resolvable:$true] %s17
      %20 = dma.hbm_to_vmem [thread:$0]  %s16, 128, %s18, [#allocation3]
    $region5: #{tpu_custom_call.1} parent=1 // pred_fallthru
      _
    // Predicated region
    $region6: #{tpu_custom_call.1} parent=1 // pred_check
      _
    $region7: #{tpu_custom_call.1} parent=1 // pred_check_branch
      %22 = sbr.rel (0) target = $region9
    $region8: #{tpu_custom_call.1} parent=1 // pred_region
      %24 = vsyncadd [#allocation5], 0
      %s26 = sshll.u32 %s1, 4
      %s27 = int_to_ptr.hbm [resolvable:$true] %s26
      %s28 = sshll.u32 [#allocation4], 4
      %s29 = int_to_ptr.vmem [resolvable:$true] %s28
      %31 = dma.hbm_to_vmem [thread:$0]  %s27, 128, %s29, [#allocation5]
    $region9: #{tpu_custom_call.1} parent=1 // pred_fallthru
      _
    // Predicated region
    $region10: #{tpu_custom_call.1} parent=1 // pred_check
      _
    $region11: #{tpu_custom_call.1} parent=1 // pred_check_branch
      %33 = sbr.rel (0) target = $region13
    $region12: #{tpu_custom_call.1} parent=1 // pred_region
      %35 = vsyncadd [#allocation5], 0
      %s36 = sshll.u32 %s2, 4
      %s37 = int_to_ptr.hbm [resolvable:$true] %s36
      %s38 = sshll.u32 [#allocation6], 4
      %s39 = int_to_ptr.vmem [resolvable:$true] %s38
      %44 = dma.hbm_to_vmem [thread:$0]  %s37, 3968, %s39, [#allocation5], 128, 128, 8
    $region13: #{tpu_custom_call.1} parent=1 // pred_fallthru
      _
    // Predicated region
    $region14: #{tpu_custom_call.1} parent=1 // pred_check
      _
    $region15: #{tpu_custom_call.1} parent=1 // pred_check_branch
      %46 = sbr.rel (0) target = $region17
    $region16: #{tpu_custom_call.1} parent=1 // pred_region
      %48 = dma.done [#allocation3], 128
    $region17: #{tpu_custom_call.1} parent=1 // pred_fallthru
      _
    // Predicated region
    $region18: #{tpu_custom_call.1} parent=1 // pred_check
      _
    $region19: #{tpu_custom_call.1} parent=1 // pred_check_branch
      %50 = sbr.rel (0) target = $region21
    $region20: #{tpu_custom_call.1} parent=1 // pred_region
      %52 = dma.done [#allocation5], 128
    $region21: #{tpu_custom_call.1} parent=1 // pred_fallthru
      _
    // Predicated region
    $region22: #{tpu_custom_call.1} parent=1 // pred_check
      _
    $region23: #{tpu_custom_call.1} parent=1 // pred_check_branch
      %54 = sbr.rel (0) target = $region25
    $region24: #{tpu_custom_call.1} parent=1 // pred_region
      %56 = dma.done [#allocation5], 3968
    $region25: #{tpu_custom_call.1} parent=1 // pred_fallthru
      _
    %v57 = vld [vmem:[#allocation6] sm:$0x1]
    %v58 = vld [vmem:[#allocation6 + $0x1] sm:$0x1]
    %v59 = vld [vmem:[#allocation6 + $0x2] sm:$0x1]
    %v60 = vld [vmem:[#allocation6 + $0x3] sm:$0x1]
    %v61 = vld [vmem:[#allocation6 + $0x4] sm:$0x1]
    %v62 = vld [vmem:[#allocation6 + $0x5] sm:$0x1]
    %v63 = vld [vmem:[#allocation6 + $0x6] sm:$0x1]
    %v64 = vld [vmem:[#allocation6 + $0x7] sm:$0x1]
    %v65 = vld [vmem:[#allocation6 + $0x8] sm:$0x1]
    %v66 = vld [vmem:[#allocation6 + $0x9] sm:$0x1]
    %v67 = vld [vmem:[#allocation6 + $0xa] sm:$0x1]
    %v68 = vld [vmem:[#allocation6 + $0xb] sm:$0x1]
    %v69 = vld [vmem:[#allocation6 + $0xc] sm:$0x1]
    %v70 = vld [vmem:[#allocation6 + $0x10] sm:$0xff]
    %v71 = vld [vmem:[#allocation6 + $0x18] sm:$0xff]
    %v72 = vld [vmem:[#allocation6 + $0x20] sm:$0xff]
    %v73 = vld [vmem:[#allocation6 + $0x28] sm:$0xff]
    %v74 = vld [vmem:[#allocation6 + $0x30] sm:$0xff]
    %v75 = vld [vmem:[#allocation6 + $0x38] sm:$0xff]
    %v76 = vld [vmem:[#allocation6 + $0x40] sm:$0xff]
    %v77 = vld [vmem:[#allocation6 + $0x48] sm:$0xff]
    %v78 = vld [vmem:[#allocation6 + $0x50] sm:$0xff]
    %v79 = vld [vmem:[#allocation6 + $0x58] sm:$0xff]
    %v80 = vld [vmem:[#allocation6 + $0x60] sm:$0xff]
    %v81 = vld [vmem:[#allocation6 + $0x68] sm:$0xff]
    %v82 = vld [vmem:[#allocation6 + $0x70] sm:$0xff]
    %v83 = vld [vmem:[#allocation6 + $0x78] sm:$0xff]
    %v84 = vld [vmem:[#allocation6 + $0x80] sm:$0xff]
    %v85 = vld [vmem:[#allocation6 + $0x88] sm:$0xff]
    %v86 = vld [vmem:[#allocation6 + $0x90] sm:$0xff]
    %v87 = vld [vmem:[#allocation6 + $0x98] sm:$0xff]
    %v88 = vld [vmem:[#allocation6 + $0xa0] sm:$0xff]
    %v89 = vld [vmem:[#allocation6 + $0xa8] sm:$0xff]
    %v90 = vld [vmem:[#allocation6 + $0xb0] sm:$0xff]
    %v91 = vld [vmem:[#allocation6 + $0xb8] sm:$0xff]
    %v92 = vld [vmem:[#allocation6 + $0xc0] sm:$0xff]
    %v93 = vld [vmem:[#allocation6 + $0xc8] sm:$0xff]
    %v94 = vld [vmem:[#allocation6 + $0xd0] sm:$0xff]
    %v95 = vld [vmem:[#allocation6 + $0xd8] sm:$0xff]
    %v96 = vld [vmem:[#allocation6 + $0xe0] sm:$0xff]
    %v97 = vld [vmem:[#allocation6 + $0xe8] sm:$0xff]
    %v98 = vld [vmem:[#allocation6 + $0xf0] sm:$0xff]
    %v99 = vld [vmem:[#allocation2] sm:$0xff]
    %vm100 = vcmask 261120
    %v101 = vsel %vm100, %v99, 0.0
    %102 = vadd.xlane.f32.xlu0 %v101
    %v103 = vpop.xlane.xlu0 %102
    %v104 = vrcp.pop 32.0
    %v105 = vmul.f32 32.0, %v104
    %v106 = vsub.f32 1.0, %v105
    %v107 = vmul.f32 %v104, %v106
    %v108 = vadd.f32 %v104, %v107
    %vm109 = vweird.f32 %v104
    %v110 = vsel %vm109, %v104, %v108
    %v111 = vmul.f32 %v103, %v110
    %v112 = vsub.f32 %v99, %v111
    %v113 = vmul.f32 %v112, %v112
    %v114 = vsel %vm100, %v113, 0.0
    %115 = vadd.xlane.f32.xlu0 %v114
    %v116 = vpop.xlane.xlu0 %115
    %v117 = vmul.f32 %v116, %v110
    %v118 = vadd.f32 %v117, 1e-05
    %v119 = vrsqrt.pop %v118
    %v120 = vmul.f32 %v119, %v118
    %v121 = vmul.f32 %v120, %v119
    %v122 = vmul.f32 0.5, %v121
    %v123 = vsub.f32 1.5, %v122
    %v124 = vmul.f32 %v119, %v123
    %vm125 = vweird.f32 %v118
    %vm126 = vweird.f32 %v119
    %vm127 = vmor %vm125, %vm126
    %v128 = vsel %vm127, %v119, %v124
    %v129 = vmul.f32 %v112, %v128
    %v130 = vperm.slane %v57, 0
    %v131 = vmul.f32 %v129, %v130
    %v132 = vperm.slane %v58, 0
    %v133 = vadd.f32 %v131, %v132
    %v134 = vperm.slane %v59, 0
    %v136 = vsel %vm100, %v133, 0
    %138 = vmatpush.msra.mxu0 0.0
    %139 = vmatpush.msra.mxu0 0.0
    %140 = vmatpush.msra.mxu0 0.0
    %141 = vmatpush.msra.mxu0 0.0
    %142 = vmatpush.msra.mxu0 0.0
    %143 = vmatpush.msra.mxu0 0.0
    %144 = vmatpush.msra.mxu0 0.0
    %145 = vmatpush.msra.mxu0 0.0
    %146 = vmatpush.msra.mxu0 0.0
    %147 = vmatpush.msra.mxu0 0.0
    %148 = vmatpush.msra.mxu0 0.0
    %149 = vmatpush.msra.mxu0 0.0
    %150 = vmatpush.msra.mxu0 %v73
    %151 = vmatpush.msra.mxu0 %v72
    %152 = vmatpush.msra.mxu0 %v71
    %153 = vmatpush.msra.mxu0 %v70
    %154 = vmatmul.f32.gmra.mxu0 %v136
    %v155 = vpop.f32.mrf.mxu0
    %v156 = vadd.f32 %v134, %v155
    %157 = vdwg.mxu0
    %158 = vadd.xlane.f32.xlu0 %v156
    %v159 = vpop.xlane.xlu0 %158
    %v160 = vrcp.pop 128.0
    %v161 = vmul.f32 128.0, %v160
    %v162 = vsub.f32 1.0, %v161
    %v163 = vmul.f32 %v160, %v162
    %v164 = vadd.f32 %v160, %v163
    %vm165 = vweird.f32 %v160
    %v166 = vsel %vm165, %v160, %v164
    %v167 = vmul.f32 %v159, %v166
    %v168 = vsub.f32 %v156, %v167
    %v169 = vmul.f32 %v168, %v168
    %170 = vadd.xlane.f32.xlu0 %v169
    %v171 = vpop.xlane.xlu0 %170
    %v172 = vmul.f32 %v171, %v166
    %v173 = vadd.f32 %v172, 1e-05
    %v174 = vrsqrt.pop %v173
    %v175 = vmul.f32 %v174, %v173
    %v176 = vmul.f32 %v175, %v174
    %v177 = vmul.f32 0.5, %v176
    %v178 = vsub.f32 1.5, %v177
    %v179 = vmul.f32 %v174, %v178
    %vm180 = vweird.f32 %v173
    %vm181 = vweird.f32 %v174
    %vm182 = vmor %vm180, %vm181
    %v183 = vsel %vm182, %v174, %v179
    %v184 = vmul.f32 %v168, %v183
    %v185 = vperm.slane %v60, 0
    %v186 = vmul.f32 %v184, %v185
    %v187 = vperm.slane %v61, 0
    %v188 = vadd.f32 %v186, %v187
    %v189 = vmax.f32 %v188, 0.0
    %v190 = vld [vmem:[#allocation4] sm:$0xff]
    %v191 = vperm.slane %v62, 0
    %vm192 = vcmask 64512
    %v194 = vsel %vm192, %v190, 0
    %196 = vmatpush.msra.mxu0 0.0
    %197 = vmatpush.msra.mxu0 0.0
    %198 = vmatpush.msra.mxu0 0.0
    %199 = vmatpush.msra.mxu0 0.0
    %200 = vmatpush.msra.mxu0 0.0
    %201 = vmatpush.msra.mxu0 0.0
    %202 = vmatpush.msra.mxu0 0.0
    %203 = vmatpush.msra.mxu0 0.0
    %204 = vmatpush.msra.mxu0 0.0
    %205 = vmatpush.msra.mxu0 0.0
    %206 = vmatpush.msra.mxu0 0.0
    %207 = vmatpush.msra.mxu0 0.0
    %208 = vmatpush.msra.mxu0 0.0
    %209 = vmatpush.msra.mxu0 0.0
    %210 = vmatpush.msra.mxu0 0.0
    %211 = vmatpush.msra.mxu0 %v98
    %212 = vmatmul.f32.gmra.mxu0 %v194
    %v213 = vpop.f32.mrf.mxu0
    %v214 = vadd.f32 %v191, %v213
    %215 = vdwg.mxu0
    %vm216 = vcmask 523264
    %v217 = vsel %vm216, %v214, 0.0
    %218 = vadd.xlane.f32.xlu0 %v217
    %v219 = vpop.xlane.xlu0 %218
    %v220 = vrcp.pop 64.0
    %v221 = vmul.f32 64.0, %v220
    %v222 = vsub.f32 1.0, %v221
    %v223 = vmul.f32 %v220, %v222
    %v224 = vadd.f32 %v220, %v223
    %vm225 = vweird.f32 %v220
    %v226 = vsel %vm225, %v220, %v224
    %v227 = vmul.f32 %v219, %v226
    %v228 = vsub.f32 %v214, %v227
    %v229 = vmul.f32 %v228, %v228
    %v230 = vsel %vm216, %v229, 0.0
    %231 = vadd.xlane.f32.xlu0 %v230
    %v232 = vpop.xlane.xlu0 %231
    %v233 = vmul.f32 %v232, %v226
    %v234 = vadd.f32 %v233, 1e-05
    %v235 = vrsqrt.pop %v234
    %v236 = vmul.f32 %v235, %v234
    %v237 = vmul.f32 %v236, %v235
    %v238 = vmul.f32 0.5, %v237
    %v239 = vsub.f32 1.5, %v238
    %v240 = vmul.f32 %v235, %v239
    %vm241 = vweird.f32 %v234
    %vm242 = vweird.f32 %v235
    %vm243 = vmor %vm241, %vm242
    %v244 = vsel %vm243, %v235, %v240
    %v245 = vmul.f32 %v228, %v244
    %v246 = vperm.slane %v63, 0
    %v247 = vmul.f32 %v245, %v246
    %v248 = vperm.slane %v64, 0
    %v249 = vadd.f32 %v247, %v248
    %v250 = vmax.f32 %v249, 0.0
    %v252 = vsel %vm216, %v250, 0
    %254 = vmatpush.msra.mxu0 0.0
    %255 = vmatpush.msra.mxu0 0.0
    %256 = vmatpush.msra.mxu0 0.0
    %257 = vmatpush.msra.mxu0 0.0
    %258 = vmatpush.msra.mxu0 0.0
    %259 = vmatpush.msra.mxu0 0.0
    %260 = vmatpush.msra.mxu0 0.0
    %261 = vmatpush.msra.mxu0 0.0
    %262 = vmatpush.msra.mxu0 %v97
    %263 = vmatpush.msra.mxu0 %v96
    %264 = vmatpush.msra.mxu0 %v95
    %265 = vmatpush.msra.mxu0 %v94
    %266 = vmatpush.msra.mxu0 %v93
    %267 = vmatpush.msra.mxu0 %v92
    %268 = vmatpush.msra.mxu0 %v91
    %269 = vmatpush.msra.mxu0 %v90
    %270 = vmatmul.f32.gmra.mxu0 %v252
    %v271 = vpop.f32.mrf.mxu0
    %v272 = vadd.f32 0.0, %v271
    %273 = vdwg.mxu0
    %274 = vmatpush.msra.mxu0 %v89
    %275 = vmatpush.msra.mxu0 %v88
    %276 = vmatpush.msra.mxu0 %v87
    %277 = vmatpush.msra.mxu0 %v86
    %278 = vmatpush.msra.mxu0 %v85
    %279 = vmatpush.msra.mxu0 %v84
    %280 = vmatpush.msra.mxu0 %v83
    %281 = vmatpush.msra.mxu0 %v82
    %282 = vmatpush.msra.mxu0 %v81
    %283 = vmatpush.msra.mxu0 %v80
    %284 = vmatpush.msra.mxu0 %v79
    %285 = vmatpush.msra.mxu0 %v78
    %286 = vmatpush.msra.mxu0 %v77
    %287 = vmatpush.msra.mxu0 %v76
    %288 = vmatpush.msra.mxu0 %v75
    %289 = vmatpush.msra.mxu0 %v74
    %290 = vmatmul.f32.gmra.mxu0 %v189
    %v291 = vpop.f32.mrf.mxu0
    %v292 = vadd.f32 %v272, %v291
    %293 = vdwg.mxu0
    %v294 = vperm.slane %v65, 0
    %v295 = vadd.f32 %v292, %v294
    %v296 = vsel %vm216, %v295, 0.0
    %297 = vadd.xlane.f32.xlu0 %v296
    %v298 = vpop.xlane.xlu0 %297
    %v299 = vmul.f32 %v298, %v226
    %v300 = vsub.f32 %v295, %v299
    %v301 = vmul.f32 %v300, %v300
    %v302 = vsel %vm216, %v301, 0.0
    %303 = vadd.xlane.f32.xlu0 %v302
    %v304 = vpop.xlane.xlu0 %303
    %v305 = vmul.f32 %v304, %v226
    %v306 = vadd.f32 %v305, 1e-05
    %v307 = vrsqrt.pop %v306
    %v308 = vmul.f32 %v307, %v306
    %v309 = vmul.f32 %v308, %v307
    %v310 = vmul.f32 0.5, %v309
    %v311 = vsub.f32 1.5, %v310
    %v312 = vmul.f32 %v307, %v311
    %vm313 = vweird.f32 %v306
    %vm314 = vweird.f32 %v307
    %vm315 = vmor %vm313, %vm314
    %v316 = vsel %vm315, %v307, %v312
    %v317 = vmul.f32 %v300, %v316
    %v318 = vperm.slane %v66, 0
    %v319 = vmul.f32 %v317, %v318
    %v320 = vperm.slane %v67, 0
    %v321 = vadd.f32 %v319, %v320
    %v322 = vmax.f32 %v321, 0.0
    %v323 = vperm.slane %v68, 0
    %v324 = vmul.f32 %v322, %v323
    %v325 = vsel %vm216, %v324, 0.0
    %326 = vadd.xlane.f32.xlu0 %v325
    %v327 = vpop.xlane.xlu0 %326
    %v328 = vperm.slane %v69, 0
    %v329 = vadd.f32 %v327, %v328
    %vm330 = vcmask 7168
    %331 = vst.msk [vmem:[%s3] sm:$0xff] %vm330, %v329
    // Predicated region
    $region26: #{tpu_custom_call.1} parent=1 // pred_check
      _
    $region27: #{tpu_custom_call.1} parent=1 // pred_check_branch
      %333 = sbr.rel (0) target = $region29
    $region28: #{tpu_custom_call.1} parent=1 // pred_region
      _
    $region29: #{tpu_custom_call.1} parent=1 // pred_fallthru
      _
    // Predicated region
    $region30: #{tpu_custom_call.1} parent=1 // pred_check
      _
    $region31: #{tpu_custom_call.1} parent=1 // pred_check_branch
      %335 = sbr.rel (0) target = $region33
    $region32: #{tpu_custom_call.1} parent=1 // pred_region
      _
    $region33: #{tpu_custom_call.1} parent=1 // pred_fallthru
      _
    %336 = vsyncpa [#allocation3], 1
    %337 = vsyncpa [#allocation5], 1

</llo_original>
